<compile_context>
chip_gen: v7x
topology: tpu7x:2x2x1
jax: 0.10.0
libtpu: 0.0.40
codegen_flags: <defaults>
</compile_context>

<pallas_src>
import numpy as np
import jax
import jax.numpy as jnp
from jax.experimental import pallas as pl
from jax.experimental.pallas import tpu as pltpu


def _round_up(n, m):
    return ((n + m - 1) // m) * m


# ----------------------------- Pallas kernel ------------------------------ #
def _discriminator_kernel(x_ref,
                          w1_ref, b1_ref,
                          w2_ref, b2_ref,
                          w3_ref, b3_ref,
                          wl1_ref, bl1_ref,
                          wl2_ref, bl2_ref,
                          wl3_ref, bl3_ref,
                          o_ref):
    leaky = lambda v: jnp.where(v > 0, v, 0.01 * v)      # nn.LeakyReLU(0.01)
    bf16 = jnp.bfloat16
    f32 = jnp.float32

    x = x_ref[...]                                       # (TB, 4) f32
    w1 = w1_ref[...]                                     # (4, 32) f32

    # conv1 center tap (K=4) on the VPU: 4 broadcast FMAs, no MXU push/pop.
    h = (x[:, 0:1] * w1[0:1, :] +
         x[:, 1:2] * w1[1:2, :] +
         x[:, 2:3] * w1[2:3, :] +
         x[:, 3:4] * w1[3:4, :]) + b1_ref[...]
    h = leaky(h)                                         # (TB, 32) f32

    # conv2 center tap: bf16 MXU matmul, f32 accumulate.
    h = jnp.dot(h.astype(bf16), w2_ref[...],
                preferred_element_type=f32) + b2_ref[...]
    h = leaky(h)                                         # (TB, 64)

    # conv3 center tap.
    h = jnp.dot(h.astype(bf16), w3_ref[...],
                preferred_element_type=f32) + b3_ref[...]
    h = leaky(h)                                         # (TB, 128)

    # linear1 (128 -> 220, padded to 256).
    h = jnp.dot(h.astype(bf16), wl1_ref[...],
                preferred_element_type=f32) + bl1_ref[...]
    h = leaky(h)                                         # (TB, 256); cols >=220 stay 0

    # linear2 (220 -> 220, padded to 256) + ReLU.
    h = jnp.dot(h.astype(bf16), wl2_ref[...],
                preferred_element_type=f32) + bl2_ref[...]
    h = jnp.maximum(h, 0.0)                              # (TB, 256)

    # linear3 (220 -> 1), padded to 128 output lanes; only column 0 is real.
    y = jnp.dot(h.astype(bf16), wl3_ref[...],
                preferred_element_type=f32) + bl3_ref[...]   # (TB, 128) f32

    # Lane-dense-over-batch store: transpose (TB,128)->(128,TB) on the XLU
    # (idle slot, essentially free) and store only row 0 -> (1, TB) block,
    # cutting output HBM writeback ~128x vs a (TB,128) f32 store.
    o_ref[...] = y.T[0:1, :]


# ------------------------- one-time weight preparation ---------------------- #
def prepare_params(p, matmul_dtype=jnp.bfloat16):
    """Transpose / center-tap-slice / zero-pad / cast the PyTorch-style params.

    Done once, outside the per-call path, so no weight re-materialization from
    HBM happens per forward call.
    """
    f32 = jnp.float32

    def pad2(a, rows, cols):
        return jnp.pad(a, ((0, rows - a.shape[0]), (0, cols - a.shape[1])))

    w1 = p["conv1_w"][:, :, 2].T.astype(f32)                       # (4, 32), VPU path stays f32
    b1 = p["conv1_b"].reshape(1, -1).astype(f32)                   # (1, 32)
    w2 = p["conv2_w"][:, :, 2].T.astype(matmul_dtype)              # (32, 64)
    b2 = p["conv2_b"].reshape(1, -1).astype(f32)                   # (1, 64)
    w3 = p["conv3_w"][:, :, 2].T.astype(matmul_dtype)              # (64, 128)
    b3 = p["conv3_b"].reshape(1, -1).astype(f32)                   # (1, 128)

    wl1 = pad2(p["lin1_w"].T, 128, 256).astype(matmul_dtype)       # (128, 256)
    bl1 = pad2(p["lin1_b"].reshape(1, -1), 1, 256).astype(f32)     # (1, 256)
    wl2 = pad2(p["lin2_w"].T, 256, 256).astype(matmul_dtype)       # (256, 256)
    bl2 = pad2(p["lin2_b"].reshape(1, -1), 1, 256).astype(f32)     # (1, 256)
    wl3 = pad2(p["lin3_w"].T, 256, 128).astype(matmul_dtype)       # (256, 128)
    bl3 = pad2(p["lin3_b"].reshape(1, -1), 1, 128).astype(f32)     # (1, 128)

    return (w1, b1, w2, b2, w3, b3, wl1, bl1, wl2, bl2, wl3, bl3)


# --------------------------------- forward --------------------------------- #
def discriminator_forward(x_ncw, prep, tb=4096):
    """x_ncw: (B, 4, 1) float32 NCW like the PyTorch module. prep: prepare_params(...)."""
    B, C, L = x_ncw.shape
    assert C == 4 and L == 1, "flatten in forward() requires L == 1"
    x = x_ncw[:, :, 0].astype(jnp.float32)                         # (B, 4)

    # Batch tile: multiple of 8 (BlockSpec sublane rule), capped so the grid has
    # >= 2 steps whenever the batch allows (keeps both v7x TensorCores busy).
    half = -(-B // 2)                                              # ceil(B / 2)
    tb_eff = min(tb, _round_up(half, 8))
    tb_eff = max(8, _round_up(tb_eff, 8))
    Bp = _round_up(B, tb_eff)
    if Bp != B:                                                    # pad the tail tile
        x = jnp.pad(x, ((0, Bp - B), (0, 0)))
    num_steps = Bp // tb_eff
    grid = (num_steps,)

    # Weights/biases: constant block index -> DMA'd once, stay VMEM-resident.
    w_specs = [pl.BlockSpec(a.shape, lambda i: (0, 0)) for a in prep]

    weight_bytes = int(sum(int(np.prod(a.shape)) * a.dtype.itemsize for a in prep))
    cost = pl.CostEstimate(
        flops=2 * Bp * (4 * 32 + 32 * 64 + 64 * 128 + 128 * 256 + 256 * 256 + 256 * 128),
        transcendentals=0,
        bytes_accessed=Bp * 16 + Bp * 4 + weight_bytes,
    )

    out = pl.pallas_call(
        _discriminator_kernel,
        # Lane-dense-over-batch output: one (1, tb_eff) f32 row per grid step.
        out_shape=jax.ShapeDtypeStruct((num_steps, tb_eff), jnp.float32),
        grid_spec=pltpu.PrefetchScalarGridSpec(
            num_scalar_prefetch=0,
            grid=grid,
            in_specs=[pl.BlockSpec((tb_eff, 4), lambda i: (i, 0))] + w_specs,
            out_specs=pl.BlockSpec((1, tb_eff), lambda i: (i, 0)),
        ),
        compiler_params=pltpu.CompilerParams(
            dimension_semantics=("parallel",),                     # megacore on v7x
            vmem_limit_bytes=48 * 1024 * 1024),                    # headroom for large tb on v5e
        cost_estimate=cost,
    )(x, *prep)

    return out.reshape(-1)[:B, None]                               # (B, 1)


discriminator_forward_jit = jax.jit(discriminator_forward, static_argnames=("tb",))


# --------------------------- parameter creation ---------------------------- #
def init_params(key):
    """Deterministic, PyTorch-style uniform(-1/sqrt(fan_in), 1/sqrt(fan_in))."""
    def uniform(key, shape, fan_in):
        bound = 1.0 / np.sqrt(fan_in)
        return jax.random.uniform(key, shape, jnp.float32, -bound, bound)

    keys = jax.random.split(key, 12)
    p = {}
    # Conv1d weights: (out_ch, in_ch, k)
    p["conv1_w"] = uniform(keys[0], (32, 4, 5), 4 * 5)
    p["conv1_b"] = uniform(keys[1], (32,), 4 * 5)
    p["conv2_w"] = uniform(keys[2], (64, 32, 5), 32 * 5)
    p["conv2_b"] = uniform(keys[3], (64,), 32 * 5)
    p["conv3_w"] = uniform(keys[4], (128, 64, 5), 64 * 5)
    p["conv3_b"] = uniform(keys[5], (128,), 64 * 5)
    # Linear weights: (out_feat, in_feat)
    p["lin1_w"] = uniform(keys[6], (220, 128), 128)
    p["lin1_b"] = uniform(keys[7], (220,), 128)
    p["lin2_w"] = uniform(keys[8], (220, 220), 220)
    p["lin2_b"] = uniform(keys[9], (220,), 220)
    p["lin3_w"] = uniform(keys[10], (1, 220), 220)
    p["lin3_b"] = uniform(keys[11], (1,), 220)
    return p


# ---------------------------- plain-JAX reference --------------------------- #
def reference_forward(x_ncw, p):
    """Faithful fp32 re-implementation with real 'same' conv1d, for validation."""
    leaky = lambda v: jnp.where(v > 0, v, 0.01 * v)

    def conv1d_same(x, w, b):  # x: (B, Cin, L), w: (Cout, Cin, 5)
        y = jax.lax.conv_general_dilated(
            x, w, window_strides=(1,), padding="SAME",
            dimension_numbers=("NCH", "OIH", "NCH"))
        return y + b[None, :, None]

    h = leaky(conv1d_same(x_ncw, p["conv1_w"], p["conv1_b"]))
    h = leaky(conv1d_same(h, p["conv2_w"], p["conv2_b"]))
    h = leaky(conv1d_same(h, p["conv3_w"], p["conv3_b"]))
    h = h.reshape(h.shape[0], h.shape[1])                          # (B, 128)
    h = leaky(h @ p["lin1_w"].T + p["lin1_b"])
    h = jnp.maximum(h @ p["lin2_w"].T + p["lin2_b"], 0.0)
    return h @ p["lin3_w"].T + p["lin3_b"]                         # (B, 1)


if __name__ == "__main__":
    key = jax.random.PRNGKey(0)
    k_params, k_x1, k_x2 = jax.random.split(key, 3)

    params = init_params(k_params)
    prep = prepare_params(params)          # hoisted weight prep (done once)

    # Small shape consistent with the module: (batch=8, channels=4, length=1).
    x = jax.random.normal(k_x1, (8, 4, 1), dtype=jnp.float32)
    out = jax.block_until_ready(discriminator_forward_jit(x, prep))
    ref = jax.block_until_ready(reference_forward(x, params))
    # bf16 MXU path -> compare against the fp32 reference at bf16-appropriate tolerance.
    np.testing.assert_allclose(np.asarray(out), np.asarray(ref), rtol=1e-2, atol=1e-2)
    assert out.shape == (8, 1)

    # Exercise the multi-step grid + ragged-batch padding path (3 grid steps).
    x2 = jax.random.normal(k_x2, (37, 4, 1), dtype=jnp.float32)
    out2 = jax.block_until_ready(discriminator_forward_jit(x2, prep, tb=16))
    ref2 = jax.block_until_ready(reference_forward(x2, params))
    np.testing.assert_allclose(np.asarray(out2), np.asarray(ref2), rtol=1e-2, atol=1e-2)
    assert out2.shape == (37, 1)

    print("KERNEL_OK")
</pallas_src>

<mosaic_0001>
module attributes {stable_mosaic.version = 11 : i64} {
  func.func @_discriminator_kernel(%arg0: i32, %arg1: memref<8x4xf32, #tpu.memory_space<vmem>>, %arg2: memref<4x32xf32, #tpu.memory_space<vmem>>, %arg3: memref<1x32xf32, #tpu.memory_space<vmem>>, %arg4: memref<32x64xbf16, #tpu.memory_space<vmem>>, %arg5: memref<1x64xf32, #tpu.memory_space<vmem>>, %arg6: memref<64x128xbf16, #tpu.memory_space<vmem>>, %arg7: memref<1x128xf32, #tpu.memory_space<vmem>>, %arg8: memref<128x256xbf16, #tpu.memory_space<vmem>>, %arg9: memref<1x256xf32, #tpu.memory_space<vmem>>, %arg10: memref<256x256xbf16, #tpu.memory_space<vmem>>, %arg11: memref<1x256xf32, #tpu.memory_space<vmem>>, %arg12: memref<256x128xbf16, #tpu.memory_space<vmem>>, %arg13: memref<1x128xf32, #tpu.memory_space<vmem>>, %arg14: memref<1x8xf32, #tpu.memory_space<vmem>>) attributes {dimension_semantics = [#tpu.dimension_semantics<parallel>], iteration_bounds = array<i64: 1>, scalar_prefetch = 0 : i64, scratch_operands = 0 : i64, tpu.core_type = #tpu.core_type<tc>, window_params = [{transform_indices = @transform_0, window_bounds = array<i64: 8, 4>}, {pipeline_mode = #tpu.pipeline_mode<synchronous>, transform_indices = @transform_1, window_bounds = array<i64: 4, 32>}, {pipeline_mode = #tpu.pipeline_mode<synchronous>, transform_indices = @transform_2, window_bounds = array<i64: 1, 32>}, {pipeline_mode = #tpu.pipeline_mode<synchronous>, transform_indices = @transform_3, window_bounds = array<i64: 32, 64>}, {pipeline_mode = #tpu.pipeline_mode<synchronous>, transform_indices = @transform_4, window_bounds = array<i64: 1, 64>}, {pipeline_mode = #tpu.pipeline_mode<synchronous>, transform_indices = @transform_5, window_bounds = array<i64: 64, 128>}, {pipeline_mode = #tpu.pipeline_mode<synchronous>, transform_indices = @transform_6, window_bounds = array<i64: 1, 128>}, {pipeline_mode = #tpu.pipeline_mode<synchronous>, transform_indices = @transform_7, window_bounds = array<i64: 128, 256>}, {pipeline_mode = #tpu.pipeline_mode<synchronous>, transform_indices = @transform_8, window_bounds = array<i64: 1, 256>}, {pipeline_mode = #tpu.pipeline_mode<synchronous>, transform_indices = @transform_9, window_bounds = array<i64: 256, 256>}, {pipeline_mode = #tpu.pipeline_mode<synchronous>, transform_indices = @transform_10, window_bounds = array<i64: 1, 256>}, {pipeline_mode = #tpu.pipeline_mode<synchronous>, transform_indices = @transform_11, window_bounds = array<i64: 256, 128>}, {pipeline_mode = #tpu.pipeline_mode<synchronous>, transform_indices = @transform_12, window_bounds = array<i64: 1, 128>}, {transform_indices = @transform_13, window_bounds = array<i64: 1, 8>}]} {
    %c0 = arith.constant 0 : index
    %c0_0 = arith.constant 0 : index
    %0 = vector.load %arg1[%c0, %c0_0] : memref<8x4xf32, #tpu.memory_space<vmem>>, vector<8x4xf32>
    %c0_1 = arith.constant 0 : index
    %c0_2 = arith.constant 0 : index
    %1 = vector.load %arg2[%c0_1, %c0_2] : memref<4x32xf32, #tpu.memory_space<vmem>>, vector<4x32xf32>
    %2 = vector.extract_strided_slice %0 {offsets = [0, 0], sizes = [8, 1], strides = [1, 1]} : vector<8x4xf32> to vector<8x1xf32>
    %3 = vector.extract_strided_slice %1 {offsets = [0, 0], sizes = [1, 32], strides = [1, 1]} : vector<4x32xf32> to vector<1x32xf32>
    %4 = vector.broadcast %2 : vector<8x1xf32> to vector<8x32xf32>
    %5 = vector.broadcast %3 : vector<1x32xf32> to vector<8x32xf32>
    %6 = arith.mulf %4, %5 : vector<8x32xf32>
    %7 = vector.extract_strided_slice %0 {offsets = [0, 1], sizes = [8, 1], strides = [1, 1]} : vector<8x4xf32> to vector<8x1xf32>
    %8 = vector.extract_strided_slice %1 {offsets = [1, 0], sizes = [1, 32], strides = [1, 1]} : vector<4x32xf32> to vector<1x32xf32>
    %9 = vector.broadcast %7 : vector<8x1xf32> to vector<8x32xf32>
    %10 = vector.broadcast %8 : vector<1x32xf32> to vector<8x32xf32>
    %11 = arith.mulf %9, %10 : vector<8x32xf32>
    %12 = arith.addf %6, %11 : vector<8x32xf32>
    %13 = vector.extract_strided_slice %0 {offsets = [0, 2], sizes = [8, 1], strides = [1, 1]} : vector<8x4xf32> to vector<8x1xf32>
    %14 = vector.extract_strided_slice %1 {offsets = [2, 0], sizes = [1, 32], strides = [1, 1]} : vector<4x32xf32> to vector<1x32xf32>
    %15 = vector.broadcast %13 : vector<8x1xf32> to vector<8x32xf32>
    %16 = vector.broadcast %14 : vector<1x32xf32> to vector<8x32xf32>
    %17 = arith.mulf %15, %16 : vector<8x32xf32>
    %18 = arith.addf %12, %17 : vector<8x32xf32>
    %19 = vector.extract_strided_slice %0 {offsets = [0, 3], sizes = [8, 1], strides = [1, 1]} : vector<8x4xf32> to vector<8x1xf32>
    %20 = vector.extract_strided_slice %1 {offsets = [3, 0], sizes = [1, 32], strides = [1, 1]} : vector<4x32xf32> to vector<1x32xf32>
    %21 = vector.broadcast %19 : vector<8x1xf32> to vector<8x32xf32>
    %22 = vector.broadcast %20 : vector<1x32xf32> to vector<8x32xf32>
    %23 = arith.mulf %21, %22 : vector<8x32xf32>
    %24 = arith.addf %18, %23 : vector<8x32xf32>
    %c0_3 = arith.constant 0 : index
    %c0_4 = arith.constant 0 : index
    %25 = vector.load %arg3[%c0_3, %c0_4] : memref<1x32xf32, #tpu.memory_space<vmem>>, vector<1x32xf32>
    %26 = vector.broadcast %25 : vector<1x32xf32> to vector<8x32xf32>
    %27 = arith.addf %24, %26 : vector<8x32xf32>
    %cst = arith.constant 0.000000e+00 : f32
    %28 = vector.broadcast %cst : f32 to vector<8x32xf32>
    %29 = arith.cmpf ogt, %27, %28 : vector<8x32xf32>
    %cst_5 = arith.constant 0.00999999977 : f32
    %30 = vector.broadcast %cst_5 : f32 to vector<8x32xf32>
    %31 = arith.mulf %30, %27 : vector<8x32xf32>
    %32 = arith.select %29, %27, %31 : vector<8x32xi1>, vector<8x32xf32>
    %33 = arith.truncf %32 : vector<8x32xf32> to vector<8x32xbf16>
    %c0_6 = arith.constant 0 : index
    %c0_7 = arith.constant 0 : index
    %34 = vector.load %arg4[%c0_6, %c0_7] : memref<32x64xbf16, #tpu.memory_space<vmem>>, vector<32x64xbf16>
    %cst_8 = arith.constant dense<0.000000e+00> : vector<8x64xf32>
    %35 = tpu.matmul %33, %34, %cst_8 {dimension_numbers = #tpu.dot_dimension_numbers<[1], [0], [0], [1], [0, 0, 1, 1], [], []>} : vector<8x32xbf16>, vector<32x64xbf16>, vector<8x64xf32> -> vector<8x64xf32>
    %c0_9 = arith.constant 0 : index
    %c0_10 = arith.constant 0 : index
    %36 = vector.load %arg5[%c0_9, %c0_10] : memref<1x64xf32, #tpu.memory_space<vmem>>, vector<1x64xf32>
    %37 = vector.broadcast %36 : vector<1x64xf32> to vector<8x64xf32>
    %38 = arith.addf %35, %37 : vector<8x64xf32>
    %cst_11 = arith.constant 0.000000e+00 : f32
    %39 = vector.broadcast %cst_11 : f32 to vector<8x64xf32>
    %40 = arith.cmpf ogt, %38, %39 : vector<8x64xf32>
    %cst_12 = arith.constant 0.00999999977 : f32
    %41 = vector.broadcast %cst_12 : f32 to vector<8x64xf32>
    %42 = arith.mulf %41, %38 : vector<8x64xf32>
    %43 = arith.select %40, %38, %42 : vector<8x64xi1>, vector<8x64xf32>
    %44 = arith.truncf %43 : vector<8x64xf32> to vector<8x64xbf16>
    %c0_13 = arith.constant 0 : index
    %c0_14 = arith.constant 0 : index
    %45 = vector.load %arg6[%c0_13, %c0_14] : memref<64x128xbf16, #tpu.memory_space<vmem>>, vector<64x128xbf16>
    %cst_15 = arith.constant dense<0.000000e+00> : vector<8x128xf32>
    %46 = tpu.matmul %44, %45, %cst_15 {dimension_numbers = #tpu.dot_dimension_numbers<[1], [0], [0], [1], [0, 0, 1, 1], [], []>} : vector<8x64xbf16>, vector<64x128xbf16>, vector<8x128xf32> -> vector<8x128xf32>
    %c0_16 = arith.constant 0 : index
    %c0_17 = arith.constant 0 : index
    %47 = vector.load %arg7[%c0_16, %c0_17] : memref<1x128xf32, #tpu.memory_space<vmem>>, vector<1x128xf32>
    %48 = vector.broadcast %47 : vector<1x128xf32> to vector<8x128xf32>
    %49 = arith.addf %46, %48 : vector<8x128xf32>
    %cst_18 = arith.constant 0.000000e+00 : f32
    %50 = vector.broadcast %cst_18 : f32 to vector<8x128xf32>
    %51 = arith.cmpf ogt, %49, %50 : vector<8x128xf32>
    %cst_19 = arith.constant 0.00999999977 : f32
    %52 = vector.broadcast %cst_19 : f32 to vector<8x128xf32>
    %53 = arith.mulf %52, %49 : vector<8x128xf32>
    %54 = arith.select %51, %49, %53 : vector<8x128xi1>, vector<8x128xf32>
    %55 = arith.truncf %54 : vector<8x128xf32> to vector<8x128xbf16>
    %c0_20 = arith.constant 0 : index
    %c0_21 = arith.constant 0 : index
    %56 = vector.load %arg8[%c0_20, %c0_21] : memref<128x256xbf16, #tpu.memory_space<vmem>>, vector<128x256xbf16>
    %cst_22 = arith.constant dense<0.000000e+00> : vector<8x256xf32>
    %57 = tpu.matmul %55, %56, %cst_22 {dimension_numbers = #tpu.dot_dimension_numbers<[1], [0], [0], [1], [0, 0, 1, 1], [], []>} : vector<8x128xbf16>, vector<128x256xbf16>, vector<8x256xf32> -> vector<8x256xf32>
    %c0_23 = arith.constant 0 : index
    %c0_24 = arith.constant 0 : index
    %58 = vector.load %arg9[%c0_23, %c0_24] : memref<1x256xf32, #tpu.memory_space<vmem>>, vector<1x256xf32>
    %59 = vector.broadcast %58 : vector<1x256xf32> to vector<8x256xf32>
    %60 = arith.addf %57, %59 : vector<8x256xf32>
    %cst_25 = arith.constant 0.000000e+00 : f32
    %61 = vector.broadcast %cst_25 : f32 to vector<8x256xf32>
    %62 = arith.cmpf ogt, %60, %61 : vector<8x256xf32>
    %cst_26 = arith.constant 0.00999999977 : f32
    %63 = vector.broadcast %cst_26 : f32 to vector<8x256xf32>
    %64 = arith.mulf %63, %60 : vector<8x256xf32>
    %65 = arith.select %62, %60, %64 : vector<8x256xi1>, vector<8x256xf32>
    %66 = arith.truncf %65 : vector<8x256xf32> to vector<8x256xbf16>
    %c0_27 = arith.constant 0 : index
    %c0_28 = arith.constant 0 : index
    %67 = vector.load %arg10[%c0_27, %c0_28] : memref<256x256xbf16, #tpu.memory_space<vmem>>, vector<256x256xbf16>
    %cst_29 = arith.constant dense<0.000000e+00> : vector<8x256xf32>
    %68 = tpu.matmul %66, %67, %cst_29 {dimension_numbers = #tpu.dot_dimension_numbers<[1], [0], [0], [1], [0, 0, 1, 1], [], []>} : vector<8x256xbf16>, vector<256x256xbf16>, vector<8x256xf32> -> vector<8x256xf32>
    %c0_30 = arith.constant 0 : index
    %c0_31 = arith.constant 0 : index
    %69 = vector.load %arg11[%c0_30, %c0_31] : memref<1x256xf32, #tpu.memory_space<vmem>>, vector<1x256xf32>
    %70 = vector.broadcast %69 : vector<1x256xf32> to vector<8x256xf32>
    %71 = arith.addf %68, %70 : vector<8x256xf32>
    %cst_32 = arith.constant 0.000000e+00 : f32
    %72 = vector.broadcast %cst_32 : f32 to vector<8x256xf32>
    %73 = arith.maximumf %71, %72 : vector<8x256xf32>
    %74 = arith.truncf %73 : vector<8x256xf32> to vector<8x256xbf16>
    %c0_33 = arith.constant 0 : index
    %c0_34 = arith.constant 0 : index
    %75 = vector.load %arg12[%c0_33, %c0_34] : memref<256x128xbf16, #tpu.memory_space<vmem>>, vector<256x128xbf16>
    %cst_35 = arith.constant dense<0.000000e+00> : vector<8x128xf32>
    %76 = tpu.matmul %74, %75, %cst_35 {dimension_numbers = #tpu.dot_dimension_numbers<[1], [0], [0], [1], [0, 0, 1, 1], [], []>} : vector<8x256xbf16>, vector<256x128xbf16>, vector<8x128xf32> -> vector<8x128xf32>
    %c0_36 = arith.constant 0 : index
    %c0_37 = arith.constant 0 : index
    %77 = vector.load %arg13[%c0_36, %c0_37] : memref<1x128xf32, #tpu.memory_space<vmem>>, vector<1x128xf32>
    %78 = vector.broadcast %77 : vector<1x128xf32> to vector<8x128xf32>
    %79 = arith.addf %76, %78 : vector<8x128xf32>
    %80 = tpu.transpose %79, [1, 0] : vector<8x128xf32> -> vector<128x8xf32>
    %81 = vector.extract_strided_slice %80 {offsets = [0, 0], sizes = [1, 8], strides = [1, 1]} : vector<128x8xf32> to vector<1x8xf32>
    %c0_38 = arith.constant 0 : index
    %c0_39 = arith.constant 0 : index
    %82 = vector.load %arg14[%c0_38, %c0_39] : memref<1x8xf32, #tpu.memory_space<vmem>>, vector<1x8xf32>
    tpu.vector_store %arg14[%c0_38, %c0_39], %81 {strides = array<i32>} : memref<1x8xf32, #tpu.memory_space<vmem>>, vector<1x8xf32>,
    return
  }
  func.func @transform_0(%arg0: i32) -> (i32, i32) {
    %c0_i32 = arith.constant 0 : i32
    %c0_i32_0 = arith.constant 0 : i32
    return %arg0, %c0_i32 : i32, i32
  }
  func.func @transform_1(%arg0: i32) -> (i32, i32) {
    %c0_i32 = arith.constant 0 : i32
    %c0_i32_0 = arith.constant 0 : i32
    %c0_i32_1 = arith.constant 0 : i32
    return %c0_i32, %c0_i32_0 : i32, i32
  }
  func.func @transform_2(%arg0: i32) -> (i32, i32) {
    %c0_i32 = arith.constant 0 : i32
    %c0_i32_0 = arith.constant 0 : i32
    %c0_i32_1 = arith.constant 0 : i32
    return %c0_i32, %c0_i32_0 : i32, i32
  }
  func.func @transform_3(%arg0: i32) -> (i32, i32) {
    %c0_i32 = arith.constant 0 : i32
    %c0_i32_0 = arith.constant 0 : i32
    %c0_i32_1 = arith.constant 0 : i32
    return %c0_i32, %c0_i32_0 : i32, i32
  }
  func.func @transform_4(%arg0: i32) -> (i32, i32) {
    %c0_i32 = arith.constant 0 : i32
    %c0_i32_0 = arith.constant 0 : i32
    %c0_i32_1 = arith.constant 0 : i32
    return %c0_i32, %c0_i32_0 : i32, i32
  }
  func.func @transform_5(%arg0: i32) -> (i32, i32) {
    %c0_i32 = arith.constant 0 : i32
    %c0_i32_0 = arith.constant 0 : i32
    %c0_i32_1 = arith.constant 0 : i32
    return %c0_i32, %c0_i32_0 : i32, i32
  }
  func.func @transform_6(%arg0: i32) -> (i32, i32) {
    %c0_i32 = arith.constant 0 : i32
    %c0_i32_0 = arith.constant 0 : i32
    %c0_i32_1 = arith.constant 0 : i32
    return %c0_i32, %c0_i32_0 : i32, i32
  }
  func.func @transform_7(%arg0: i32) -> (i32, i32) {
    %c0_i32 = arith.constant 0 : i32
    %c0_i32_0 = arith.constant 0 : i32
    %c0_i32_1 = arith.constant 0 : i32
    return %c0_i32, %c0_i32_0 : i32, i32
  }
  func.func @transform_8(%arg0: i32) -> (i32, i32) {
    %c0_i32 = arith.constant 0 : i32
    %c0_i32_0 = arith.constant 0 : i32
    %c0_i32_1 = arith.constant 0 : i32
    return %c0_i32, %c0_i32_0 : i32, i32
  }
  func.func @transform_9(%arg0: i32) -> (i32, i32) {
    %c0_i32 = arith.constant 0 : i32
    %c0_i32_0 = arith.constant 0 : i32
    %c0_i32_1 = arith.constant 0 : i32
    return %c0_i32, %c0_i32_0 : i32, i32
  }
  func.func @transform_10(%arg0: i32) -> (i32, i32) {
    %c0_i32 = arith.constant 0 : i32
    %c0_i32_0 = arith.constant 0 : i32
    %c0_i32_1 = arith.constant 0 : i32
    return %c0_i32, %c0_i32_0 : i32, i32
  }
  func.func @transform_11(%arg0: i32) -> (i32, i32) {
    %c0_i32 = arith.constant 0 : i32
    %c0_i32_0 = arith.constant 0 : i32
    %c0_i32_1 = arith.constant 0 : i32
    return %c0_i32, %c0_i32_0 : i32, i32
  }
  func.func @transform_12(%arg0: i32) -> (i32, i32) {
    %c0_i32 = arith.constant 0 : i32
    %c0_i32_0 = arith.constant 0 : i32
    %c0_i32_1 = arith.constant 0 : i32
    return %c0_i32, %c0_i32_0 : i32, i32
  }
  func.func @transform_13(%arg0: i32) -> (i32, i32) {
    %c0_i32 = arith.constant 0 : i32
    %c0_i32_0 = arith.constant 0 : i32
    return %arg0, %c0_i32 : i32, i32
  }
}

</mosaic_0001>

<llo_original>
// kernel: discriminator_forward.1
$region0: #{discriminator_forward.1}
  #allocation0 [shape = 'u32[]', space=smem, size = 0x4, offset = 0x4, fixed_abs, tag = 'smem constant byte address 0x4 - core index']
  #allocation1 [shape = 'u32[144,128]{1,0:T(1,128)}', space=vmem, size = 0x12000, scoped, tag = 'internal scratch']
  %s0 = inlined_call_operand.vmem [shape: f32[8,4], index: 0, kind: input, shape index: {}]
  %s1 = inlined_call_operand.hbm [shape: f32[4,32], index: 1, kind: input, shape index: {}]
  %s2 = inlined_call_operand.hbm [shape: f32[1,32], index: 2, kind: input, shape index: {}]
  %s3 = inlined_call_operand.hbm [shape: bf16[32,64], index: 3, kind: input, shape index: {}]
  %s4 = inlined_call_operand.hbm [shape: f32[1,64], index: 4, kind: input, shape index: {}]
  %s5 = inlined_call_operand.vmem [shape: bf16[64,128], index: 5, kind: input, shape index: {}]
  %s6 = inlined_call_operand.vmem [shape: f32[1,128], index: 6, kind: input, shape index: {}]
  %s7 = inlined_call_operand.hbm [shape: bf16[128,256], index: 7, kind: input, shape index: {}]
  %s8 = inlined_call_operand.vmem [shape: f32[1,256], index: 8, kind: input, shape index: {}]
  %s9 = inlined_call_operand.hbm [shape: bf16[256,256], index: 9, kind: input, shape index: {}]
  %s10 = inlined_call_operand.vmem [shape: f32[1,256], index: 10, kind: input, shape index: {}]
  %s11 = inlined_call_operand.hbm [shape: bf16[256,128], index: 11, kind: input, shape index: {}]
  %s12 = inlined_call_operand.vmem [shape: f32[1,128], index: 12, kind: input, shape index: {}]
  %s13 = inlined_call_operand.hbm [shape: f32[1,8], index: 13, kind: output, shape index: {}]
  %s14 = sld [smem:[#allocation0]]
  $region90: #{discriminator_forward.1} parent=0
    _
  %s16 = ssub.s32 1, %s14
  %s17 = scalar_select 0, %s16, %s14
  $region1: #{discriminator_forward.1} parent=0
    #allocation2 [shape = 'u8[2048]{0}', space=vmem, size = 0x800, scoped, tag = 'input window, operand 1, single buffered']
    #allocation3 [shape = 's32[1]{0}', space=sflag, size = 0x4, scoped, tag = 'scoped memory for discriminator_forward.1']
    #allocation4 [shape = 's32[1]{0}', space=sflag, size = 0x4, scoped, tag = 'scoped memory for discriminator_forward.1']
    #allocation5 [shape = 'u8[512]{0}', space=vmem, size = 0x400, scoped, tag = 'input window, operand 2, single buffered']
    #allocation6 [shape = 's32[1]{0}', space=sflag, size = 0x4, scoped, tag = 'scoped memory for discriminator_forward.1']
    #allocation7 [shape = 'u8[8192]{0}', space=vmem, size = 0x2000, scoped, tag = 'input window, operand 3, single buffered']
    #allocation8 [shape = 'u8[512]{0}', space=vmem, size = 0x400, scoped, tag = 'input window, operand 4, single buffered']
    #allocation9 [shape = 's32[1]{0}', space=sflag, size = 0x4, scoped, tag = 'scoped memory for discriminator_forward.1']
    #allocation10 [shape = 'u8[65536]{0}', space=vmem, size = 0x10000, scoped, tag = 'input window, operand 7, single buffered']
    #allocation11 [shape = 'u8[131072]{0}', space=vmem, size = 0x20000, scoped, tag = 'input window, operand 9, single buffered']
    #allocation12 [shape = 's32[1]{0}', space=sflag, size = 0x4, scoped, tag = 'scoped memory for discriminator_forward.1']
    #allocation13 [shape = 'u8[65536]{0}', space=vmem, size = 0x10000, scoped, tag = 'input window, operand 11, single buffered']
    #allocation14 [shape = 'u8[512]{0}', space=vmem, size = 0x400, scoped, tag = 'output window, operand 0, single buffered']
    %18 = vsyncpa [#allocation3], 0
    %19 = vsyncpa [#allocation6], 0
    %20 = vsyncpa [#allocation9], 0
    %21 = vsyncpa [#allocation12], 0
    %22 = vsyncpa [#allocation4], 0
    // Predicated region
    $region2: #{discriminator_forward.1} parent=1 // pred_check
      _
    $region3: #{discriminator_forward.1} parent=1 // pred_check_branch
      %24 = sbr.rel (0) target = $region5
    $region4: #{discriminator_forward.1} parent=1 // pred_region
      _
    $region5: #{discriminator_forward.1} parent=1 // pred_fallthru
      _
    // Predicated region
    $region6: #{discriminator_forward.1} parent=1 // pred_check
      _
    $region7: #{discriminator_forward.1} parent=1 // pred_check_branch
      %26 = sbr.rel (0) target = $region9
    $region8: #{discriminator_forward.1} parent=1 // pred_region
      %s28 = ssub.s32 64, 64
      %29 = vsyncadd [#allocation3], %s28
      %s31 = sshll.u32 [#allocation2], 4
      %s32 = int_to_ptr.vmem [resolvable:$true] %s31
      %34 = dma.hbm_to_vmem [thread:$0]  %s1, 64, %s32, [#allocation3]
    $region9: #{discriminator_forward.1} parent=1 // pred_fallthru
      _
    // Predicated region
    $region10: #{discriminator_forward.1} parent=1 // pred_check
      _
    $region11: #{discriminator_forward.1} parent=1 // pred_check_branch
      %36 = sbr.rel (0) target = $region13
    $region12: #{discriminator_forward.1} parent=1 // pred_region
      %s38 = ssub.s32 16, 16
      %39 = vsyncadd [#allocation6], %s38
      %s41 = sshll.u32 [#allocation5], 4
      %s42 = int_to_ptr.vmem [resolvable:$true] %s41
      %44 = dma.hbm_to_vmem [thread:$0]  %s2, 16, %s42, [#allocation6]
    $region13: #{discriminator_forward.1} parent=1 // pred_fallthru
      _
    // Predicated region
    $region14: #{discriminator_forward.1} parent=1 // pred_check
      _
    $region15: #{discriminator_forward.1} parent=1 // pred_check_branch
      %46 = sbr.rel (0) target = $region17
    $region16: #{discriminator_forward.1} parent=1 // pred_region
      %s48 = ssub.s32 256, 256
      %49 = vsyncadd [#allocation6], %s48
      %s50 = sshll.u32 [#allocation7], 4
      %s51 = int_to_ptr.vmem [resolvable:$true] %s50
      %56 = dma.hbm_to_vmem [thread:$0]  %s3, 256, %s51, [#allocation6], 64, 64, 4
    $region17: #{discriminator_forward.1} parent=1 // pred_fallthru
      _
    // Predicated region
    $region18: #{discriminator_forward.1} parent=1 // pred_check
      _
    $region19: #{discriminator_forward.1} parent=1 // pred_check_branch
      %58 = sbr.rel (0) target = $region21
    $region20: #{discriminator_forward.1} parent=1 // pred_region
      %s60 = ssub.s32 16, 16
      %61 = vsyncadd [#allocation9], %s60
      %s63 = sshll.u32 [#allocation8], 4
      %s64 = int_to_ptr.vmem [resolvable:$true] %s63
      %66 = dma.hbm_to_vmem [thread:$0]  %s4, 16, %s64, [#allocation9]
    $region21: #{discriminator_forward.1} parent=1 // pred_fallthru
      _
    // Predicated region
    $region22: #{discriminator_forward.1} parent=1 // pred_check
      _
    $region23: #{discriminator_forward.1} parent=1 // pred_check_branch
      %68 = sbr.rel (0) target = $region25
    $region24: #{discriminator_forward.1} parent=1 // pred_region
      _
    $region25: #{discriminator_forward.1} parent=1 // pred_fallthru
      _
    // Predicated region
    $region26: #{discriminator_forward.1} parent=1 // pred_check
      _
    $region27: #{discriminator_forward.1} parent=1 // pred_check_branch
      %70 = sbr.rel (0) target = $region29
    $region28: #{discriminator_forward.1} parent=1 // pred_region
      _
    $region29: #{discriminator_forward.1} parent=1 // pred_fallthru
      _
    // Predicated region
    $region30: #{discriminator_forward.1} parent=1 // pred_check
      _
    $region31: #{discriminator_forward.1} parent=1 // pred_check_branch
      %72 = sbr.rel (0) target = $region33
    $region32: #{discriminator_forward.1} parent=1 // pred_region
      %s74 = ssub.s32 2048, 2048
      %75 = vsyncadd [#allocation9], %s74
      %s76 = sshll.u32 [#allocation10], 4
      %s77 = int_to_ptr.vmem [resolvable:$true] %s76
      %82 = dma.hbm_to_vmem [thread:$0]  %s7, 2048, %s77, [#allocation9], 128, 128, 8
    $region33: #{discriminator_forward.1} parent=1 // pred_fallthru
      _
    // Predicated region
    $region34: #{discriminator_forward.1} parent=1 // pred_check
      _
    $region35: #{discriminator_forward.1} parent=1 // pred_check_branch
      %84 = sbr.rel (0) target = $region37
    $region36: #{discriminator_forward.1} parent=1 // pred_region
      _
    $region37: #{discriminator_forward.1} parent=1 // pred_fallthru
      _
    // Predicated region
    $region38: #{discriminator_forward.1} parent=1 // pred_check
      _
    $region39: #{discriminator_forward.1} parent=1 // pred_check_branch
      %86 = sbr.rel (0) target = $region41
    $region40: #{discriminator_forward.1} parent=1 // pred_region
      %s88 = ssub.s32 4096, 4096
      %89 = vsyncadd [#allocation12], %s88
      %s90 = sshll.u32 [#allocation11], 4
      %s91 = int_to_ptr.vmem [resolvable:$true] %s90
      %96 = dma.hbm_to_vmem [thread:$0]  %s9, 4096, %s91, [#allocation12], 128, 128, 8
    $region41: #{discriminator_forward.1} parent=1 // pred_fallthru
      _
    // Predicated region
    $region42: #{discriminator_forward.1} parent=1 // pred_check
      _
    $region43: #{discriminator_forward.1} parent=1 // pred_check_branch
      %98 = sbr.rel (0) target = $region45
    $region44: #{discriminator_forward.1} parent=1 // pred_region
      _
    $region45: #{discriminator_forward.1} parent=1 // pred_fallthru
      _
    // Predicated region
    $region46: #{discriminator_forward.1} parent=1 // pred_check
      _
    $region47: #{discriminator_forward.1} parent=1 // pred_check_branch
      %100 = sbr.rel (0) target = $region49
    $region48: #{discriminator_forward.1} parent=1 // pred_region
      %s102 = ssub.s32 2048, 2048
      %103 = vsyncadd [#allocation12], %s102
      %s104 = sshll.u32 [#allocation13], 4
      %s105 = int_to_ptr.vmem [resolvable:$true] %s104
      %110 = dma.hbm_to_vmem [thread:$0]  %s11, 2048, %s105, [#allocation12], 64, 64, 4
    $region49: #{discriminator_forward.1} parent=1 // pred_fallthru
      _
    // Predicated region
    $region50: #{discriminator_forward.1} parent=1 // pred_check
      _
    $region51: #{discriminator_forward.1} parent=1 // pred_check_branch
      %112 = sbr.rel (0) target = $region53
    $region52: #{discriminator_forward.1} parent=1 // pred_region
      _
    $region53: #{discriminator_forward.1} parent=1 // pred_fallthru
      _
    // Predicated region
    $region54: #{discriminator_forward.1} parent=1 // pred_check
      _
    $region55: #{discriminator_forward.1} parent=1 // pred_check_branch
      %114 = sbr.rel (0) target = $region57
    $region56: #{discriminator_forward.1} parent=1 // pred_region
      %115 = dma.done [#allocation3], 64
    $region57: #{discriminator_forward.1} parent=1 // pred_fallthru
      _
    // Predicated region
    $region58: #{discriminator_forward.1} parent=1 // pred_check
      _
    $region59: #{discriminator_forward.1} parent=1 // pred_check_branch
      %117 = sbr.rel (0) target = $region61
    $region60: #{discriminator_forward.1} parent=1 // pred_region
      %118 = dma.done [#allocation6], 16
    $region61: #{discriminator_forward.1} parent=1 // pred_fallthru
      _
    // Predicated region
    $region62: #{discriminator_forward.1} parent=1 // pred_check
      _
    $region63: #{discriminator_forward.1} parent=1 // pred_check_branch
      %120 = sbr.rel (0) target = $region65
    $region64: #{discriminator_forward.1} parent=1 // pred_region
      %121 = dma.done [#allocation6], 256
    $region65: #{discriminator_forward.1} parent=1 // pred_fallthru
      _
    // Predicated region
    $region66: #{discriminator_forward.1} parent=1 // pred_check
      _
    $region67: #{discriminator_forward.1} parent=1 // pred_check_branch
      %123 = sbr.rel (0) target = $region69
    $region68: #{discriminator_forward.1} parent=1 // pred_region
      %124 = dma.done [#allocation9], 16
    $region69: #{discriminator_forward.1} parent=1 // pred_fallthru
      _
    // Predicated region
    $region70: #{discriminator_forward.1} parent=1 // pred_check
      _
    $region71: #{discriminator_forward.1} parent=1 // pred_check_branch
      %126 = sbr.rel (0) target = $region73
    $region72: #{discriminator_forward.1} parent=1 // pred_region
      %127 = dma.done [#allocation9], 2048
    $region73: #{discriminator_forward.1} parent=1 // pred_fallthru
      _
    // Predicated region
    $region74: #{discriminator_forward.1} parent=1 // pred_check
      _
    $region75: #{discriminator_forward.1} parent=1 // pred_check_branch
      %129 = sbr.rel (0) target = $region77
    $region76: #{discriminator_forward.1} parent=1 // pred_region
      %130 = dma.done [#allocation12], 4096
    $region77: #{discriminator_forward.1} parent=1 // pred_fallthru
      _
    // Predicated region
    $region78: #{discriminator_forward.1} parent=1 // pred_check
      _
    $region79: #{discriminator_forward.1} parent=1 // pred_check_branch
      %132 = sbr.rel (0) target = $region81
    $region80: #{discriminator_forward.1} parent=1 // pred_region
      %133 = dma.done [#allocation12], 2048
    $region81: #{discriminator_forward.1} parent=1 // pred_fallthru
      _
    %v135 = vld [vmem:[%s0] sm:$0xff]
    %v136 = vld [vmem:[#allocation2] sm:$0xf]
    %138 = vset.pattern.permute.xlu0 0
    %139 = vperm.xlu0 %138, %v135
    %v140 = vpop.permute.xlu0 %139
    %v142 = vlaneseq
    %v143 = vshrl.u32 %v142, 7
    %v144 = vsub.s32 0, %v143
    %v145 = vrot.slane %v136, %v144
    %v146 = vmul.f32 %v140, %v145
    %147 = vset.pattern.permute.xlu0 1
    %148 = vperm.xlu0 %147, %v135
    %v149 = vpop.permute.xlu0 %148
    %v151 = vlaneseq
    %v152 = vshrl.u32 %v151, 7
    %v153 = vsub.s32 1, %v152
    %v154 = vrot.slane %v136, %v153
    %v155 = vmul.f32 %v149, %v154
    %v156 = vadd.f32 %v146, %v155
    %157 = vset.pattern.permute.xlu0 2
    %158 = vperm.xlu0 %157, %v135
    %v159 = vpop.permute.xlu0 %158
    %v161 = vlaneseq
    %v162 = vshrl.u32 %v161, 7
    %v163 = vsub.s32 2, %v162
    %v164 = vrot.slane %v136, %v163
    %v165 = vmul.f32 %v159, %v164
    %v166 = vadd.f32 %v156, %v165
    %167 = vset.pattern.permute.xlu0 3
    %168 = vperm.xlu0 %167, %v135
    %v169 = vpop.permute.xlu0 %168
    %v171 = vlaneseq
    %v172 = vshrl.u32 %v171, 7
    %v173 = vsub.s32 3, %v172
    %v174 = vrot.slane %v136, %v173
    %v175 = vmul.f32 %v169, %v174
    %v176 = vadd.f32 %v166, %v175
    %v177 = vld [vmem:[#allocation5] sm:$0x1]
    %v179 = vlaneseq
    %v180 = vshrl.u32 %v179, 7
    %v181 = vsub.s32 0, %v180
    %v182 = vrot.slane %v177, %v181
    %v184 = vadd.f32 %v176, %v182
    %vm185 = vcmp.gt.f32.partialorder %v184, 0.0
    %v186 = vmul.f32 %v184, 0.01
    %v187 = vsel %vm185, %v184, %v186
    %v188 = vpack.c.bf16 %v187, %v187
    %v189 = vld [vmem:[#allocation7] sm:$0xf]
    %v190 = vld [vmem:[#allocation7 + $0x4] sm:$0xf]
    %v191 = vld [vmem:[#allocation7 + $0x8] sm:$0xf]
    %v192 = vld [vmem:[#allocation7 + $0xc] sm:$0xf]
    %v193 = vld [vmem:[#allocation8] sm:$0x1]
    %v195 = vlaneseq
    %v196 = vshrl.u32 %v195, 7
    %v197 = vsub.s32 0, %v196
    %v198 = vrot.slane %v193, %v197
    %v204 = vunpack.c.l.b16 %v189
    %v205 = vunpack.c.l.b16 %v190
    %v206 = vunpack.c.l.b16 %v191
    %v207 = vunpack.c.l.b16 %v192
    %v208 = vpack.c.b16 %v205, %v204
    %v209 = vpack.c.b16 %v207, %v206
    %vm212 = vcmask 261120
    %v214 = vsel %vm212, %v188, 0
    %216 = vmatprep.subr.bf16.mxu0 0
    %217 = vmatpush1.bf16.msra.mxu0 %v208
    %218 = vmatprep.subr.bf16.mxu0 0
    %219 = vmatpush1.bf16.msra.mxu0 %v209
    %220 = vmatprep.subr.bf16.mxu0 0
    %221 = vmatpush1.bf16.msra.mxu0 0
    %222 = vmatprep.subr.bf16.mxu0 0
    %223 = vmatpush1.bf16.msra.mxu0 0
    %224 = vmatprep.subr.bf16.mxu0 0
    %225 = vmatpush1.bf16.msra.mxu0 0
    %226 = vmatprep.subr.bf16.mxu0 0
    %227 = vmatpush1.bf16.msra.mxu0 0
    %228 = vmatprep.subr.bf16.mxu0 0
    %229 = vmatpush1.bf16.msra.mxu0 0
    %230 = vmatprep.subr.bf16.mxu0 0
    %231 = vmatpush1.bf16.msra.mxu0 0
    %232 = vmatprep.subr.bf16.mxu0 0
    %233 = vmatpush1.bf16.msra.mxu0 0
    %234 = vmatprep.subr.bf16.mxu0 0
    %235 = vmatpush1.bf16.msra.mxu0 0
    %236 = vmatprep.subr.bf16.mxu0 0
    %237 = vmatpush1.bf16.msra.mxu0 0
    %238 = vmatprep.subr.bf16.mxu0 0
    %239 = vmatpush1.bf16.msra.mxu0 0
    %240 = vmatprep.subr.bf16.mxu0 0
    %241 = vmatpush1.bf16.msra.mxu0 0
    %242 = vmatprep.subr.bf16.mxu0 0
    %243 = vmatpush1.bf16.msra.mxu0 0
    %244 = vmatprep.subr.bf16.mxu0 0
    %245 = vmatpush1.bf16.msra.mxu0 0
    %246 = vmatprep.subr.bf16.mxu0 0
    %247 = vmatpush1.bf16.msra.mxu0 0
    %248 = vmatprep.mubr.bf16.mxu0 0
    %249 = vmatmul.mubr.bf16.gmra.mrb[0].mxu0 %v214
    %v250 = vpop.f32.mrb[0].mxu0
    %v251 = vadd.f32 %v198, %v250
    %v252 = vpop.f32.mrb[0].mxu0
    %v253 = vpop.f32.mrb[0].mxu0
    %v254 = vpop.f32.mrb[0].mxu0
    %255 = vdwg.mxu0
    %vm256 = vcmp.gt.f32.partialorder %v251, 0.0
    %v257 = vmul.f32 %v251, 0.01
    %v258 = vsel %vm256, %v251, %v257
    %v259 = vpack.c.bf16 %v258, %v258
    %v260 = vld [vmem:[%s5] sm:$0xf]
    %v261 = vld [vmem:[%s5 + $0x4] sm:$0xf]
    %v262 = vld [vmem:[%s5 + $0x8] sm:$0xf]
    %v263 = vld [vmem:[%s5 + $0xc] sm:$0xf]
    %v264 = vld [vmem:[%s5 + $0x10] sm:$0xf]
    %v265 = vld [vmem:[%s5 + $0x14] sm:$0xf]
    %v266 = vld [vmem:[%s5 + $0x18] sm:$0xf]
    %v267 = vld [vmem:[%s5 + $0x1c] sm:$0xf]
    %v268 = vld [vmem:[%s6] sm:$0x1]
    %v270 = vlaneseq
    %v271 = vshrl.u32 %v270, 7
    %v272 = vsub.s32 0, %v271
    %v273 = vrot.slane %v268, %v272
    %v283 = vunpack.c.l.b16 %v260
    %v284 = vunpack.c.l.b16 %v261
    %v285 = vunpack.c.l.b16 %v262
    %v286 = vunpack.c.l.b16 %v263
    %v287 = vunpack.c.l.b16 %v264
    %v288 = vunpack.c.l.b16 %v265
    %v289 = vunpack.c.l.b16 %v266
    %v290 = vunpack.c.l.b16 %v267
    %v291 = vpack.c.b16 %v284, %v283
    %v292 = vpack.c.b16 %v286, %v285
    %v293 = vpack.c.b16 %v288, %v287
    %v294 = vpack.c.b16 %v290, %v289
    %vm299 = vcmask 523264
    %v301 = vsel %vm299, %v259, 0
    %303 = vmatprep.subr.bf16.mxu0 0
    %304 = vmatpush1.bf16.msra.mxu0 %v291
    %305 = vmatprep.subr.bf16.mxu0 0
    %306 = vmatpush1.bf16.msra.mxu0 %v292
    %307 = vmatprep.subr.bf16.mxu0 0
    %308 = vmatpush1.bf16.msra.mxu0 %v293
    %309 = vmatprep.subr.bf16.mxu0 0
    %310 = vmatpush1.bf16.msra.mxu0 %v294
    %311 = vmatprep.subr.bf16.mxu0 0
    %312 = vmatpush1.bf16.msra.mxu0 0
    %313 = vmatprep.subr.bf16.mxu0 0
    %314 = vmatpush1.bf16.msra.mxu0 0
    %315 = vmatprep.subr.bf16.mxu0 0
    %316 = vmatpush1.bf16.msra.mxu0 0
    %317 = vmatprep.subr.bf16.mxu0 0
    %318 = vmatpush1.bf16.msra.mxu0 0
    %319 = vmatprep.subr.bf16.mxu0 0
    %320 = vmatpush1.bf16.msra.mxu0 0
    %321 = vmatprep.subr.bf16.mxu0 0
    %322 = vmatpush1.bf16.msra.mxu0 0
    %323 = vmatprep.subr.bf16.mxu0 0
    %324 = vmatpush1.bf16.msra.mxu0 0
    %325 = vmatprep.subr.bf16.mxu0 0
    %326 = vmatpush1.bf16.msra.mxu0 0
    %327 = vmatprep.subr.bf16.mxu0 0
    %328 = vmatpush1.bf16.msra.mxu0 0
    %329 = vmatprep.subr.bf16.mxu0 0
    %330 = vmatpush1.bf16.msra.mxu0 0
    %331 = vmatprep.subr.bf16.mxu0 0
    %332 = vmatpush1.bf16.msra.mxu0 0
    %333 = vmatprep.subr.bf16.mxu0 0
    %334 = vmatpush1.bf16.msra.mxu0 0
    %335 = vmatprep.mubr.bf16.mxu0 0
    %336 = vmatmul.mubr.bf16.gmra.mrb[0].mxu0 %v301
    %v337 = vpop.f32.mrb[0].mxu0
    %v338 = vadd.f32 %v273, %v337
    %v339 = vpop.f32.mrb[0].mxu0
    %v340 = vpop.f32.mrb[0].mxu0
    %v341 = vpop.f32.mrb[0].mxu0
    %342 = vdwg.mxu0
    %vm343 = vcmp.gt.f32.partialorder %v338, 0.0
    %v344 = vmul.f32 %v338, 0.01
    %v345 = vsel %vm343, %v338, %v344
    %v346 = vpack.c.bf16 %v345, %v345
    %v347 = vld [vmem:[#allocation10] sm:$0xff]
    %v348 = vld [vmem:[#allocation10 + $0x8] sm:$0xff]
    %v349 = vld [vmem:[#allocation10 + $0x10] sm:$0xff]
    %v350 = vld [vmem:[#allocation10 + $0x18] sm:$0xff]
    %v351 = vld [vmem:[#allocation10 + $0x20] sm:$0xff]
    %v352 = vld [vmem:[#allocation10 + $0x28] sm:$0xff]
    %v353 = vld [vmem:[#allocation10 + $0x30] sm:$0xff]
    %v354 = vld [vmem:[#allocation10 + $0x38] sm:$0xff]
    %v355 = vld [vmem:[#allocation10 + $0x40] sm:$0xff]
    %v356 = vld [vmem:[#allocation10 + $0x48] sm:$0xff]
    %v357 = vld [vmem:[#allocation10 + $0x50] sm:$0xff]
    %v358 = vld [vmem:[#allocation10 + $0x58] sm:$0xff]
    %v359 = vld [vmem:[#allocation10 + $0x60] sm:$0xff]
    %v360 = vld [vmem:[#allocation10 + $0x68] sm:$0xff]
    %v361 = vld [vmem:[#allocation10 + $0x70] sm:$0xff]
    %v362 = vld [vmem:[#allocation10 + $0x78] sm:$0xff]
    %v363 = vld [vmem:[%s8] sm:$0x3]
    %v365 = vlaneseq
    %v366 = vshrl.u32 %v365, 7
    %v367 = vsub.s32 0, %v366
    %v368 = vrot.slane %v363, %v367
    %v369 = vlaneseq
    %v370 = vshrl.u32 %v369, 7
    %v371 = vsub.s32 1, %v370
    %v372 = vrot.slane %v363, %v371
    %v391 = vunpack.c.l.b16 %v347
    %v392 = vunpack.c.h.b16 %v347
    %v393 = vunpack.c.l.b16 %v348
    %v394 = vunpack.c.h.b16 %v348
    %v395 = vunpack.c.l.b16 %v349
    %v396 = vunpack.c.h.b16 %v349
    %v397 = vunpack.c.l.b16 %v350
    %v398 = vunpack.c.h.b16 %v350
    %v399 = vunpack.c.l.b16 %v351
    %v400 = vunpack.c.h.b16 %v351
    %v401 = vunpack.c.l.b16 %v352
    %v402 = vunpack.c.h.b16 %v352
    %v403 = vunpack.c.l.b16 %v353
    %v404 = vunpack.c.h.b16 %v353
    %v405 = vunpack.c.l.b16 %v354
    %v406 = vunpack.c.h.b16 %v354
    %v407 = vunpack.c.l.b16 %v355
    %v408 = vunpack.c.h.b16 %v355
    %v409 = vunpack.c.l.b16 %v356
    %v410 = vunpack.c.h.b16 %v356
    %v411 = vunpack.c.l.b16 %v357
    %v412 = vunpack.c.h.b16 %v357
    %v413 = vunpack.c.l.b16 %v358
    %v414 = vunpack.c.h.b16 %v358
    %v415 = vunpack.c.l.b16 %v359
    %v416 = vunpack.c.h.b16 %v359
    %v417 = vunpack.c.l.b16 %v360
    %v418 = vunpack.c.h.b16 %v360
    %v419 = vunpack.c.l.b16 %v361
    %v420 = vunpack.c.h.b16 %v361
    %v421 = vunpack.c.l.b16 %v362
    %v422 = vunpack.c.h.b16 %v362
    %v423 = vpack.c.b16 %v393, %v391
    %v424 = vpack.c.b16 %v394, %v392
    %v425 = vpack.c.b16 %v397, %v395
    %v426 = vpack.c.b16 %v398, %v396
    %v427 = vpack.c.b16 %v401, %v399
    %v428 = vpack.c.b16 %v402, %v400
    %v429 = vpack.c.b16 %v405, %v403
    %v430 = vpack.c.b16 %v406, %v404
    %v431 = vpack.c.b16 %v409, %v407
    %v432 = vpack.c.b16 %v410, %v408
    %v433 = vpack.c.b16 %v413, %v411
    %v434 = vpack.c.b16 %v414, %v412
    %v435 = vpack.c.b16 %v417, %v415
    %v436 = vpack.c.b16 %v418, %v416
    %v437 = vpack.c.b16 %v421, %v419
    %v438 = vpack.c.b16 %v422, %v420
    %455 = vmatprep.subr.bf16.mxu0 %v424
    %456 = vmatpush1.bf16.msra.mxu0 %v423
    %457 = vmatprep.subr.bf16.mxu0 %v426
    %458 = vmatpush1.bf16.msra.mxu0 %v425
    %459 = vmatprep.subr.bf16.mxu0 %v428
    %460 = vmatpush1.bf16.msra.mxu0 %v427
    %461 = vmatprep.subr.bf16.mxu0 %v430
    %462 = vmatpush1.bf16.msra.mxu0 %v429
    %463 = vmatprep.subr.bf16.mxu0 %v432
    %464 = vmatpush1.bf16.msra.mxu0 %v431
    %465 = vmatprep.subr.bf16.mxu0 %v434
    %466 = vmatpush1.bf16.msra.mxu0 %v433
    %467 = vmatprep.subr.bf16.mxu0 %v436
    %468 = vmatpush1.bf16.msra.mxu0 %v435
    %469 = vmatprep.subr.bf16.mxu0 %v438
    %470 = vmatpush1.bf16.msra.mxu0 %v437
    %471 = vmatprep.subr.bf16.mxu0 0
    %472 = vmatpush1.bf16.msra.mxu0 0
    %473 = vmatprep.subr.bf16.mxu0 0
    %474 = vmatpush1.bf16.msra.mxu0 0
    %475 = vmatprep.subr.bf16.mxu0 0
    %476 = vmatpush1.bf16.msra.mxu0 0
    %477 = vmatprep.subr.bf16.mxu0 0
    %478 = vmatpush1.bf16.msra.mxu0 0
    %479 = vmatprep.subr.bf16.mxu0 0
    %480 = vmatpush1.bf16.msra.mxu0 0
    %481 = vmatprep.subr.bf16.mxu0 0
    %482 = vmatpush1.bf16.msra.mxu0 0
    %483 = vmatprep.subr.bf16.mxu0 0
    %484 = vmatpush1.bf16.msra.mxu0 0
    %485 = vmatprep.subr.bf16.mxu0 0
    %486 = vmatpush1.bf16.msra.mxu0 0
    %487 = vmatprep.mubr.bf16.mxu0 0
    %488 = vmatmul.mubr.bf16.gmra.mrb[0].mxu0 %v346
    %v489 = vpop.f32.mrb[0].mxu0
    %v490 = vadd.f32 %v368, %v489
    %v491 = vpop.f32.mrb[0].mxu0
    %v492 = vadd.f32 %v372, %v491
    %v493 = vpop.f32.mrb[0].mxu0
    %v494 = vpop.f32.mrb[0].mxu0
    %495 = vdwg.mxu0
    %vm496 = vcmp.gt.f32.partialorder %v490, 0.0
    %vm497 = vcmp.gt.f32.partialorder %v492, 0.0
    %v498 = vmul.f32 %v490, 0.01
    %v499 = vmul.f32 %v492, 0.01
    %v500 = vsel %vm496, %v490, %v498
    %v501 = vsel %vm497, %v492, %v499
    %v502 = vpack.c.bf16 %v500, %v500
    %v503 = vpack.c.bf16 %v501, %v501
    %v504 = vld [vmem:[#allocation11] sm:$0xff]
    %v505 = vld [vmem:[#allocation11 + $0x8] sm:$0xff]
    %v506 = vld [vmem:[#allocation11 + $0x10] sm:$0xff]
    %v507 = vld [vmem:[#allocation11 + $0x18] sm:$0xff]
    %v508 = vld [vmem:[#allocation11 + $0x20] sm:$0xff]
    %v509 = vld [vmem:[#allocation11 + $0x28] sm:$0xff]
    %v510 = vld [vmem:[#allocation11 + $0x30] sm:$0xff]
    %v511 = vld [vmem:[#allocation11 + $0x38] sm:$0xff]
    %v512 = vld [vmem:[#allocation11 + $0x40] sm:$0xff]
    %v513 = vld [vmem:[#allocation11 + $0x48] sm:$0xff]
    %v514 = vld [vmem:[#allocation11 + $0x50] sm:$0xff]
    %v515 = vld [vmem:[#allocation11 + $0x58] sm:$0xff]
    %v516 = vld [vmem:[#allocation11 + $0x60] sm:$0xff]
    %v517 = vld [vmem:[#allocation11 + $0x68] sm:$0xff]
    %v518 = vld [vmem:[#allocation11 + $0x70] sm:$0xff]
    %v519 = vld [vmem:[#allocation11 + $0x78] sm:$0xff]
    %v520 = vld [vmem:[#allocation11 + $0x80] sm:$0xff]
    %v521 = vld [vmem:[#allocation11 + $0x88] sm:$0xff]
    %v522 = vld [vmem:[#allocation11 + $0x90] sm:$0xff]
    %v523 = vld [vmem:[#allocation11 + $0x98] sm:$0xff]
    %v524 = vld [vmem:[#allocation11 + $0xa0] sm:$0xff]
    %v525 = vld [vmem:[#allocation11 + $0xa8] sm:$0xff]
    %v526 = vld [vmem:[#allocation11 + $0xb0] sm:$0xff]
    %v527 = vld [vmem:[#allocation11 + $0xb8] sm:$0xff]
    %v528 = vld [vmem:[#allocation11 + $0xc0] sm:$0xff]
    %v529 = vld [vmem:[#allocation11 + $0xc8] sm:$0xff]
    %v530 = vld [vmem:[#allocation11 + $0xd0] sm:$0xff]
    %v531 = vld [vmem:[#allocation11 + $0xd8] sm:$0xff]
    %v532 = vld [vmem:[#allocation11 + $0xe0] sm:$0xff]
    %v533 = vld [vmem:[#allocation11 + $0xe8] sm:$0xff]
    %v534 = vld [vmem:[#allocation11 + $0xf0] sm:$0xff]
    %v535 = vld [vmem:[#allocation11 + $0xf8] sm:$0xff]
    %v536 = vld [vmem:[%s10] sm:$0x3]
    %v538 = vlaneseq
    %v539 = vshrl.u32 %v538, 7
    %v540 = vsub.s32 0, %v539
    %v541 = vrot.slane %v536, %v540
    %v542 = vlaneseq
    %v543 = vshrl.u32 %v542, 7
    %v544 = vsub.s32 1, %v543
    %v545 = vrot.slane %v536, %v544
    %v580 = vunpack.c.l.b16 %v504
    %v581 = vunpack.c.h.b16 %v504
    %v582 = vunpack.c.l.b16 %v505
    %v583 = vunpack.c.h.b16 %v505
    %v584 = vunpack.c.l.b16 %v506
    %v585 = vunpack.c.h.b16 %v506
    %v586 = vunpack.c.l.b16 %v507
    %v587 = vunpack.c.h.b16 %v507
    %v588 = vunpack.c.l.b16 %v508
    %v589 = vunpack.c.h.b16 %v508
    %v590 = vunpack.c.l.b16 %v509
    %v591 = vunpack.c.h.b16 %v509
    %v592 = vunpack.c.l.b16 %v510
    %v593 = vunpack.c.h.b16 %v510
    %v594 = vunpack.c.l.b16 %v511
    %v595 = vunpack.c.h.b16 %v511
    %v596 = vunpack.c.l.b16 %v512
    %v597 = vunpack.c.h.b16 %v512
    %v598 = vunpack.c.l.b16 %v513
    %v599 = vunpack.c.h.b16 %v513
    %v600 = vunpack.c.l.b16 %v514
    %v601 = vunpack.c.h.b16 %v514
    %v602 = vunpack.c.l.b16 %v515
    %v603 = vunpack.c.h.b16 %v515
    %v604 = vunpack.c.l.b16 %v516
    %v605 = vunpack.c.h.b16 %v516
    %v606 = vunpack.c.l.b16 %v517
    %v607 = vunpack.c.h.b16 %v517
    %v608 = vunpack.c.l.b16 %v518
    %v609 = vunpack.c.h.b16 %v518
    %v610 = vunpack.c.l.b16 %v519
    %v611 = vunpack.c.h.b16 %v519
    %v612 = vunpack.c.l.b16 %v520
    %v613 = vunpack.c.h.b16 %v520
    %v614 = vunpack.c.l.b16 %v521
    %v615 = vunpack.c.h.b16 %v521
    %v616 = vunpack.c.l.b16 %v522
    %v617 = vunpack.c.h.b16 %v522
    %v618 = vunpack.c.l.b16 %v523
    %v619 = vunpack.c.h.b16 %v523
    %v620 = vunpack.c.l.b16 %v524
    %v621 = vunpack.c.h.b16 %v524
    %v622 = vunpack.c.l.b16 %v525
    %v623 = vunpack.c.h.b16 %v525
    %v624 = vunpack.c.l.b16 %v526
    %v625 = vunpack.c.h.b16 %v526
    %v626 = vunpack.c.l.b16 %v527
    %v627 = vunpack.c.h.b16 %v527
    %v628 = vunpack.c.l.b16 %v528
    %v629 = vunpack.c.h.b16 %v528
    %v630 = vunpack.c.l.b16 %v529
    %v631 = vunpack.c.h.b16 %v529
    %v632 = vunpack.c.l.b16 %v530
    %v633 = vunpack.c.h.b16 %v530
    %v634 = vunpack.c.l.b16 %v531
    %v635 = vunpack.c.h.b16 %v531
    %v636 = vunpack.c.l.b16 %v532
    %v637 = vunpack.c.h.b16 %v532
    %v638 = vunpack.c.l.b16 %v533
    %v639 = vunpack.c.h.b16 %v533
    %v640 = vunpack.c.l.b16 %v534
    %v641 = vunpack.c.h.b16 %v534
    %v642 = vunpack.c.l.b16 %v535
    %v643 = vunpack.c.h.b16 %v535
    %v644 = vpack.c.b16 %v582, %v580
    %v645 = vpack.c.b16 %v583, %v581
    %v646 = vpack.c.b16 %v586, %v584
    %v647 = vpack.c.b16 %v587, %v585
    %v648 = vpack.c.b16 %v590, %v588
    %v649 = vpack.c.b16 %v591, %v589
    %v650 = vpack.c.b16 %v594, %v592
    %v651 = vpack.c.b16 %v595, %v593
    %v652 = vpack.c.b16 %v598, %v596
    %v653 = vpack.c.b16 %v599, %v597
    %v654 = vpack.c.b16 %v602, %v600
    %v655 = vpack.c.b16 %v603, %v601
    %v656 = vpack.c.b16 %v606, %v604
    %v657 = vpack.c.b16 %v607, %v605
    %v658 = vpack.c.b16 %v610, %v608
    %v659 = vpack.c.b16 %v611, %v609
    %v660 = vpack.c.b16 %v614, %v612
    %v661 = vpack.c.b16 %v615, %v613
    %v662 = vpack.c.b16 %v618, %v616
    %v663 = vpack.c.b16 %v619, %v617
    %v664 = vpack.c.b16 %v622, %v620
    %v665 = vpack.c.b16 %v623, %v621
    %v666 = vpack.c.b16 %v626, %v624
    %v667 = vpack.c.b16 %v627, %v625
    %v668 = vpack.c.b16 %v630, %v628
    %v669 = vpack.c.b16 %v631, %v629
    %v670 = vpack.c.b16 %v634, %v632
    %v671 = vpack.c.b16 %v635, %v633
    %v672 = vpack.c.b16 %v638, %v636
    %v673 = vpack.c.b16 %v639, %v637
    %v674 = vpack.c.b16 %v642, %v640
    %v675 = vpack.c.b16 %v643, %v641
    %708 = vmatprep.subr.bf16.mxu0 %v645
    %709 = vmatpush1.bf16.msra.mxu0 %v644
    %710 = vmatprep.subr.bf16.mxu0 %v647
    %711 = vmatpush1.bf16.msra.mxu0 %v646
    %712 = vmatprep.subr.bf16.mxu0 %v649
    %713 = vmatpush1.bf16.msra.mxu0 %v648
    %714 = vmatprep.subr.bf16.mxu0 %v651
    %715 = vmatpush1.bf16.msra.mxu0 %v650
    %716 = vmatprep.subr.bf16.mxu0 %v653
    %717 = vmatpush1.bf16.msra.mxu0 %v652
    %718 = vmatprep.subr.bf16.mxu0 %v655
    %719 = vmatpush1.bf16.msra.mxu0 %v654
    %720 = vmatprep.subr.bf16.mxu0 %v657
    %721 = vmatpush1.bf16.msra.mxu0 %v656
    %722 = vmatprep.subr.bf16.mxu0 %v659
    %723 = vmatpush1.bf16.msra.mxu0 %v658
    %724 = vmatprep.subr.bf16.mxu0 %v661
    %725 = vmatpush1.bf16.msra.mxu0 %v660
    %726 = vmatprep.subr.bf16.mxu0 %v663
    %727 = vmatpush1.bf16.msra.mxu0 %v662
    %728 = vmatprep.subr.bf16.mxu0 %v665
    %729 = vmatpush1.bf16.msra.mxu0 %v664
    %730 = vmatprep.subr.bf16.mxu0 %v667
    %731 = vmatpush1.bf16.msra.mxu0 %v666
    %732 = vmatprep.subr.bf16.mxu0 %v669
    %733 = vmatpush1.bf16.msra.mxu0 %v668
    %734 = vmatprep.subr.bf16.mxu0 %v671
    %735 = vmatpush1.bf16.msra.mxu0 %v670
    %736 = vmatprep.subr.bf16.mxu0 %v673
    %737 = vmatpush1.bf16.msra.mxu0 %v672
    %738 = vmatprep.subr.bf16.mxu0 %v675
    %739 = vmatpush1.bf16.msra.mxu0 %v674
    %740 = vmatprep.mubr.bf16.mxu0 %v503
    %741 = vmatmul.mubr.bf16.gmra.mrb[0].mxu0 %v502
    %v742 = vpop.f32.mrb[0].mxu0
    %v743 = vadd.f32 %v541, %v742
    %v744 = vpop.f32.mrb[0].mxu0
    %v745 = vadd.f32 %v545, %v744
    %v746 = vpop.f32.mrb[0].mxu0
    %v747 = vpop.f32.mrb[0].mxu0
    %748 = vdwg.mxu0
    %v749 = vmax.f32 %v743, 0.0
    %v750 = vmax.f32 %v745, 0.0
    %v751 = vpack.c.bf16 %v749, %v749
    %v752 = vpack.c.bf16 %v750, %v750
    %v753 = vld [vmem:[#allocation13] sm:$0xf]
    %v754 = vld [vmem:[#allocation13 + $0x4] sm:$0xf]
    %v755 = vld [vmem:[#allocation13 + $0x8] sm:$0xf]
    %v756 = vld [vmem:[#allocation13 + $0xc] sm:$0xf]
    %v757 = vld [vmem:[#allocation13 + $0x10] sm:$0xf]
    %v758 = vld [vmem:[#allocation13 + $0x14] sm:$0xf]
    %v759 = vld [vmem:[#allocation13 + $0x18] sm:$0xf]
    %v760 = vld [vmem:[#allocation13 + $0x1c] sm:$0xf]
    %v761 = vld [vmem:[#allocation13 + $0x20] sm:$0xf]
    %v762 = vld [vmem:[#allocation13 + $0x24] sm:$0xf]
    %v763 = vld [vmem:[#allocation13 + $0x28] sm:$0xf]
    %v764 = vld [vmem:[#allocation13 + $0x2c] sm:$0xf]
    %v765 = vld [vmem:[#allocation13 + $0x30] sm:$0xf]
    %v766 = vld [vmem:[#allocation13 + $0x34] sm:$0xf]
    %v767 = vld [vmem:[#allocation13 + $0x38] sm:$0xf]
    %v768 = vld [vmem:[#allocation13 + $0x3c] sm:$0xf]
    %v769 = vld [vmem:[#allocation13 + $0x40] sm:$0xf]
    %v770 = vld [vmem:[#allocation13 + $0x44] sm:$0xf]
    %v771 = vld [vmem:[#allocation13 + $0x48] sm:$0xf]
    %v772 = vld [vmem:[#allocation13 + $0x4c] sm:$0xf]
    %v773 = vld [vmem:[#allocation13 + $0x50] sm:$0xf]
    %v774 = vld [vmem:[#allocation13 + $0x54] sm:$0xf]
    %v775 = vld [vmem:[#allocation13 + $0x58] sm:$0xf]
    %v776 = vld [vmem:[#allocation13 + $0x5c] sm:$0xf]
    %v777 = vld [vmem:[#allocation13 + $0x60] sm:$0xf]
    %v778 = vld [vmem:[#allocation13 + $0x64] sm:$0xf]
    %v779 = vld [vmem:[#allocation13 + $0x68] sm:$0xf]
    %v780 = vld [vmem:[#allocation13 + $0x6c] sm:$0xf]
    %v781 = vld [vmem:[#allocation13 + $0x70] sm:$0xf]
    %v782 = vld [vmem:[#allocation13 + $0x74] sm:$0xf]
    %v783 = vld [vmem:[#allocation13 + $0x78] sm:$0xf]
    %v784 = vld [vmem:[#allocation13 + $0x7c] sm:$0xf]
    %v785 = vld [vmem:[%s12] sm:$0x1]
    %v787 = vlaneseq
    %v788 = vshrl.u32 %v787, 7
    %v789 = vsub.s32 0, %v788
    %v790 = vrot.slane %v785, %v789
    %v824 = vunpack.c.l.b16 %v753
    %v825 = vunpack.c.l.b16 %v754
    %v826 = vunpack.c.l.b16 %v755
    %v827 = vunpack.c.l.b16 %v756
    %v828 = vunpack.c.l.b16 %v757
    %v829 = vunpack.c.l.b16 %v758
    %v830 = vunpack.c.l.b16 %v759
    %v831 = vunpack.c.l.b16 %v760
    %v832 = vunpack.c.l.b16 %v761
    %v833 = vunpack.c.l.b16 %v762
    %v834 = vunpack.c.l.b16 %v763
    %v835 = vunpack.c.l.b16 %v764
    %v836 = vunpack.c.l.b16 %v765
    %v837 = vunpack.c.l.b16 %v766
    %v838 = vunpack.c.l.b16 %v767
    %v839 = vunpack.c.l.b16 %v768
    %v840 = vunpack.c.l.b16 %v769
    %v841 = vunpack.c.l.b16 %v770
    %v842 = vunpack.c.l.b16 %v771
    %v843 = vunpack.c.l.b16 %v772
    %v844 = vunpack.c.l.b16 %v773
    %v845 = vunpack.c.l.b16 %v774
    %v846 = vunpack.c.l.b16 %v775
    %v847 = vunpack.c.l.b16 %v776
    %v848 = vunpack.c.l.b16 %v777
    %v849 = vunpack.c.l.b16 %v778
    %v850 = vunpack.c.l.b16 %v779
    %v851 = vunpack.c.l.b16 %v780
    %v852 = vunpack.c.l.b16 %v781
    %v853 = vunpack.c.l.b16 %v782
    %v854 = vunpack.c.l.b16 %v783
    %v855 = vunpack.c.l.b16 %v784
    %v856 = vpack.c.b16 %v825, %v824
    %v857 = vpack.c.b16 %v827, %v826
    %v858 = vpack.c.b16 %v829, %v828
    %v859 = vpack.c.b16 %v831, %v830
    %v860 = vpack.c.b16 %v833, %v832
    %v861 = vpack.c.b16 %v835, %v834
    %v862 = vpack.c.b16 %v837, %v836
    %v863 = vpack.c.b16 %v839, %v838
    %v864 = vpack.c.b16 %v841, %v840
    %v865 = vpack.c.b16 %v843, %v842
    %v866 = vpack.c.b16 %v845, %v844
    %v867 = vpack.c.b16 %v847, %v846
    %v868 = vpack.c.b16 %v849, %v848
    %v869 = vpack.c.b16 %v851, %v850
    %v870 = vpack.c.b16 %v853, %v852
    %v871 = vpack.c.b16 %v855, %v854
    %888 = vmatprep.subr.bf16.mxu0 0
    %889 = vmatpush1.bf16.msra.mxu0 %v856
    %890 = vmatprep.subr.bf16.mxu0 0
    %891 = vmatpush1.bf16.msra.mxu0 %v857
    %892 = vmatprep.subr.bf16.mxu0 0
    %893 = vmatpush1.bf16.msra.mxu0 %v858
    %894 = vmatprep.subr.bf16.mxu0 0
    %895 = vmatpush1.bf16.msra.mxu0 %v859
    %896 = vmatprep.subr.bf16.mxu0 0
    %897 = vmatpush1.bf16.msra.mxu0 %v860
    %898 = vmatprep.subr.bf16.mxu0 0
    %899 = vmatpush1.bf16.msra.mxu0 %v861
    %900 = vmatprep.subr.bf16.mxu0 0
    %901 = vmatpush1.bf16.msra.mxu0 %v862
    %902 = vmatprep.subr.bf16.mxu0 0
    %903 = vmatpush1.bf16.msra.mxu0 %v863
    %904 = vmatprep.subr.bf16.mxu0 0
    %905 = vmatpush1.bf16.msra.mxu0 %v864
    %906 = vmatprep.subr.bf16.mxu0 0
    %907 = vmatpush1.bf16.msra.mxu0 %v865
    %908 = vmatprep.subr.bf16.mxu0 0
    %909 = vmatpush1.bf16.msra.mxu0 %v866
    %910 = vmatprep.subr.bf16.mxu0 0
    %911 = vmatpush1.bf16.msra.mxu0 %v867
    %912 = vmatprep.subr.bf16.mxu0 0
    %913 = vmatpush1.bf16.msra.mxu0 %v868
    %914 = vmatprep.subr.bf16.mxu0 0
    %915 = vmatpush1.bf16.msra.mxu0 %v869
    %916 = vmatprep.subr.bf16.mxu0 0
    %917 = vmatpush1.bf16.msra.mxu0 %v870
    %918 = vmatprep.subr.bf16.mxu0 0
    %919 = vmatpush1.bf16.msra.mxu0 %v871
    %920 = vmatprep.mubr.bf16.mxu0 %v752
    %921 = vmatmul.mubr.bf16.gmra.mrb[0].mxu0 %v751
    %v922 = vpop.f32.mrb[0].mxu0
    %v923 = vadd.f32 %v790, %v922
    %v924 = vpop.f32.mrb[0].mxu0
    %v925 = vpop.f32.mrb[0].mxu0
    %v926 = vpop.f32.mrb[0].mxu0
    %927 = vdwg.mxu0
    %928 = vxpose.xlu0.b32.start [1/16] %v923, 128
    %929 = vxpose.xlu0.b32.cont [2/16] 0.0, 128
    %930 = vxpose.xlu0.b32.cont [3/16] 0.0, 128
    %931 = vxpose.xlu0.b32.cont [4/16] 0.0, 128
    %932 = vxpose.xlu0.b32.cont [5/16] 0.0, 128
    %933 = vxpose.xlu0.b32.cont [6/16] 0.0, 128
    %934 = vxpose.xlu0.b32.cont [7/16] 0.0, 128
    %935 = vxpose.xlu0.b32.cont [8/16] 0.0, 128
    %936 = vxpose.xlu0.b32.cont [9/16] 0.0, 128
    %937 = vxpose.xlu0.b32.cont [10/16] 0.0, 128
    %938 = vxpose.xlu0.b32.cont [11/16] 0.0, 128
    %939 = vxpose.xlu0.b32.cont [12/16] 0.0, 128
    %940 = vxpose.xlu0.b32.cont [13/16] 0.0, 128
    %941 = vxpose.xlu0.b32.cont [14/16] 0.0, 128
    %942 = vxpose.xlu0.b32.cont [15/16] 0.0, 128
    %943 = vxpose.xlu0.b32.end [16/16] 0.0, 128
    %v944 = vpop.trf.xlu0
    %v945 = vpop.trf.xlu0
    %v946 = vpop.trf.xlu0
    %v947 = vpop.trf.xlu0
    %v948 = vpop.trf.xlu0
    %v949 = vpop.trf.xlu0
    %v950 = vpop.trf.xlu0
    %v951 = vpop.trf.xlu0
    %v952 = vpop.trf.xlu0
    %v953 = vpop.trf.xlu0
    %v954 = vpop.trf.xlu0
    %v955 = vpop.trf.xlu0
    %v956 = vpop.trf.xlu0
    %v957 = vpop.trf.xlu0
    %v958 = vpop.trf.xlu0
    %v959 = vpop.trf.xlu0
    %vm960 = vcmask 57344
    %961 = vst.msk [vmem:[#allocation14] sm:$0x1] %vm960, %v944
    // Predicated region
    $region82: #{discriminator_forward.1} parent=1 // pred_check
      _
    $region83: #{discriminator_forward.1} parent=1 // pred_check_branch
      %963 = sbr.rel (0) target = $region85
    $region84: #{discriminator_forward.1} parent=1 // pred_region
      %s965 = ssub.s32 16, 16
      %966 = vsyncadd [#allocation4], %s965
      %s968 = sshll.u32 [#allocation14], 4
      %s969 = int_to_ptr.vmem [resolvable:$true] %s968
      %971 = dma.vmem_to_hbm [thread:$0]  %s969, 16, %s13, [#allocation4]
    $region85: #{discriminator_forward.1} parent=1 // pred_fallthru
      _
    // Predicated region
    $region86: #{discriminator_forward.1} parent=1 // pred_check
      _
    $region87: #{discriminator_forward.1} parent=1 // pred_check_branch
      %973 = sbr.rel (0) target = $region89
    $region88: #{discriminator_forward.1} parent=1 // pred_region
      %974 = dma.done [#allocation4], 16
    $region89: #{discriminator_forward.1} parent=1 // pred_fallthru
      _
    %975 = vsyncpa [#allocation3], 1
    %976 = vsyncpa [#allocation6], 1
    %977 = vsyncpa [#allocation9], 1
    %978 = vsyncpa [#allocation12], 1
    %979 = vsyncpa [#allocation4], 1

</llo_original>
